<compile_context>
chip_gen: v5e
topology: v5e:2x2
jax: 0.10.0
libtpu: 0.0.40
codegen_flags: <defaults>
</compile_context>

<pallas_src>
import functools
import math

import jax
import jax.numpy as jnp
from jax.experimental import pallas as pl
from jax.experimental.pallas import tpu as pltpu


def _fused_conv_bn_relu_kernel(p_ref, w_ref, g_ref, b_ref, o_ref, *, inv_count, eps):
    """Fused conv3x3 (as one matmul) + training-mode BN + ReLU for the whole batch.

    p_ref: (R, K*Cin)   bf16   im2col patches for all valid output positions
    w_ref: (K*Cin, 128) bf16   conv weight, channels zero-padded to 128 lanes
    g_ref, b_ref: (1, 128) f32 gamma / beta, zero-padded
    o_ref: (R, 128)     f32    lane-dense output rows
    """
    # Single MXU matmul, f32 accumulation.
    conv = jnp.dot(p_ref[...], w_ref[...],
                   preferred_element_type=jnp.float32)             # (R, 128) f32

    # Batch-norm statistics over all rows (all rows are valid positions).
    mean = jnp.sum(conv, axis=0, keepdims=True) * inv_count         # (1, 128)
    centered = conv - mean
    var = jnp.sum(centered * centered, axis=0, keepdims=True) * inv_count

    # Folded BN affine (computed once per call) + ReLU, lane-dense store.
    scale = g_ref[...] * jax.lax.rsqrt(var + eps)                   # (1, 128)
    y = centered * scale + b_ref[...]
    o_ref[...] = jnp.maximum(y, 0.0).astype(o_ref.dtype)


def block_forward(x_nchw, conv_weight_oihw, gamma, beta, *, eps=1e-5):
    """Block forward: conv3x3 (no bias, stride=1, padding=0) -> BN (batch stats) -> ReLU.

    x_nchw:           (N, Cin, H, W)      f32
    conv_weight_oihw: (Cout, Cin, 3, 3)   f32 (PyTorch OIHW)
    gamma, beta:      (Cout,)             f32
    returns:          (N, Cout, H-2, W-2) f32
    """
    # TODO(synk): only the module's default stride=1 / padding=0 path is implemented.
    N, Cin, H, W = x_nchw.shape
    Cout, _, KH, KW = conv_weight_oihw.shape
    Ho, Wo = H - KH + 1, W - KW + 1
    R = N * Ho * Wo                 # valid output positions (rows of the patch matrix)
    KC = KH * KW * Cin              # contraction size of the single matmul
    CPAD = 128                      # lane-dense padded channel dim
    assert Cout <= CPAD

    # ---- wrapper glue (tiny: ~28 KB/image of patches, O(params) for weights) ----
    # Cast x to bf16 once, then build aligned im2col patches over VALID positions only.
    x_nhwc = jnp.transpose(x_nchw, (0, 2, 3, 1)).astype(jnp.bfloat16)   # (N,H,W,Cin)
    taps = [x_nhwc[:, kh:kh + Ho, kw:kw + Wo, :]
            for kh in range(KH) for kw in range(KW)]                    # 9 x (N,Ho,Wo,Cin)
    patches = jnp.concatenate(taps, axis=-1).reshape(R, KC)             # (R, K*Cin) bf16

    # Weight as a single (K*Cin, CPAD) bf16 matrix; row order matches the tap concat.
    w_mat = jnp.transpose(conv_weight_oihw, (2, 3, 1, 0)).reshape(KC, Cout)
    w_pad = jnp.zeros((KC, CPAD), jnp.bfloat16).at[:, :Cout].set(
        w_mat.astype(jnp.bfloat16))
    gamma_pad = jnp.zeros((1, CPAD), jnp.float32).at[0, :Cout].set(
        gamma.astype(jnp.float32))
    beta_pad = jnp.zeros((1, CPAD), jnp.float32).at[0, :Cout].set(
        beta.astype(jnp.float32))

    # ---- single fused kernel: whole batch in one grid step ----
    out_rows = pl.pallas_call(
        functools.partial(_fused_conv_bn_relu_kernel,
                          inv_count=1.0 / R, eps=eps),
        out_shape=jax.ShapeDtypeStruct((R, CPAD), jnp.float32),
        grid_spec=pltpu.PrefetchScalarGridSpec(
            num_scalar_prefetch=0,
            grid=(1,),
            in_specs=[pl.BlockSpec((R, KC), lambda i: (0, 0)),
                      pl.BlockSpec((KC, CPAD), lambda i: (0, 0)),
                      pl.BlockSpec((1, CPAD), lambda i: (0, 0)),
                      pl.BlockSpec((1, CPAD), lambda i: (0, 0))],
            out_specs=pl.BlockSpec((R, CPAD), lambda i: (0, 0))),
        compiler_params=pltpu.CompilerParams(
            dimension_semantics=("arbitrary",),
            # Total VMEM footprint < 1 MiB: far under v7x's 64 MiB physical VMEM
            # (and v5e/v6e's 128 MiB); set the scoped limit explicitly anyway.
            vmem_limit_bytes=32 * 1024 * 1024),
    )(patches, w_pad, gamma_pad, beta_pad)

    # ---- wrapper glue: drop padded channels, back to NCHW ----
    y = out_rows.reshape(N, Ho, Wo, CPAD)[..., :Cout]         # (N, Ho, Wo, Cout) NHWC
    # TODO(synk): a consumer that accepts NHWC could skip this final transpose.
    return jnp.transpose(y, (0, 3, 1, 2))                     # NCHW


def _reference_forward(x_nchw, conv_weight_oihw, gamma, beta):
    """Pure-JAX f32 reference (lax conv + training-mode BN + ReLU)."""
    conv = jax.lax.conv_general_dilated(
        x_nchw, conv_weight_oihw, window_strides=(1, 1), padding="VALID",
        dimension_numbers=("NCHW", "OIHW", "NCHW"))
    mean = jnp.mean(conv, axis=(0, 2, 3), keepdims=True)
    var = jnp.mean((conv - mean) ** 2, axis=(0, 2, 3), keepdims=True)
    y = (conv - mean) * jax.lax.rsqrt(var + 1e-5)
    y = y * gamma.reshape(1, -1, 1, 1) + beta.reshape(1, -1, 1, 1)
    return jnp.maximum(y, 0.0)


if __name__ == "__main__":
    # Shapes consistent with the module: batch=2, in_planes=4, out_planes=8,
    # spatial 16x16 (valid 3x3 conv -> 14x14 output).
    N, Cin, Cout, H, W = 2, 4, 8, 16, 16

    key = jax.random.PRNGKey(0)
    kx, kw = jax.random.split(key)

    x = jax.random.normal(kx, (N, Cin, H, W), dtype=jnp.float32)

    # Deterministic Xavier-uniform conv weight (as in Block.__init__).
    fan_in = Cin * 3 * 3
    fan_out = Cout * 3 * 3
    bound = math.sqrt(6.0 / (fan_in + fan_out))
    conv_weight = jax.random.uniform(
        kw, (Cout, Cin, 3, 3), dtype=jnp.float32, minval=-bound, maxval=bound)

    # BatchNorm2d affine params at their PyTorch defaults.
    gamma = jnp.ones((Cout,), dtype=jnp.float32)
    beta = jnp.zeros((Cout,), dtype=jnp.float32)

    out = jax.jit(block_forward)(x, conv_weight, gamma, beta)
    out = jax.block_until_ready(out)
    assert out.shape == (N, Cout, H - 2, W - 2), out.shape

    ref = _reference_forward(x, conv_weight, gamma, beta)
    # Tolerance reflects bf16 MXU operands (f32 accumulation + f32 BN math).
    max_err = float(jnp.max(jnp.abs(out - ref)))
    assert jnp.allclose(out, ref, atol=2e-2, rtol=2e-2), \
        f"mismatch vs reference, max abs err={max_err}"

    print("KERNEL_OK")
</pallas_src>

<mosaic_0001>
module attributes {stable_mosaic.version = 11 : i64} {
  func.func @_fused_conv_bn_relu_kernel(%arg0: i32, %arg1: memref<392x36xbf16, #tpu.memory_space<vmem>>, %arg2: memref<36x128xbf16, #tpu.memory_space<vmem>>, %arg3: memref<1x128xf32, #tpu.memory_space<vmem>>, %arg4: memref<1x128xf32, #tpu.memory_space<vmem>>, %arg5: memref<392x128xf32, #tpu.memory_space<vmem>>) attributes {dimension_semantics = [#tpu.dimension_semantics<arbitrary>], iteration_bounds = array<i64: 1>, scalar_prefetch = 0 : i64, scratch_operands = 0 : i64, tpu.core_type = #tpu.core_type<tc>, window_params = [{pipeline_mode = #tpu.pipeline_mode<synchronous>, transform_indices = @transform_0, window_bounds = array<i64: 392, 36>}, {pipeline_mode = #tpu.pipeline_mode<synchronous>, transform_indices = @transform_1, window_bounds = array<i64: 36, 128>}, {pipeline_mode = #tpu.pipeline_mode<synchronous>, transform_indices = @transform_2, window_bounds = array<i64: 1, 128>}, {pipeline_mode = #tpu.pipeline_mode<synchronous>, transform_indices = @transform_3, window_bounds = array<i64: 1, 128>}, {pipeline_mode = #tpu.pipeline_mode<synchronous>, transform_indices = @transform_4, window_bounds = array<i64: 392, 128>}]} {
    %c0 = arith.constant 0 : index
    %c0_0 = arith.constant 0 : index
    %0 = vector.load %arg1[%c0, %c0_0] : memref<392x36xbf16, #tpu.memory_space<vmem>>, vector<392x36xbf16>
    %c0_1 = arith.constant 0 : index
    %c0_2 = arith.constant 0 : index
    %1 = vector.load %arg2[%c0_1, %c0_2] : memref<36x128xbf16, #tpu.memory_space<vmem>>, vector<36x128xbf16>
    %cst = arith.constant dense<0.000000e+00> : vector<392x128xf32>
    %2 = tpu.matmul %0, %1, %cst {dimension_numbers = #tpu.dot_dimension_numbers<[1], [0], [0], [1], [0, 0, 1, 1], [], []>} : vector<392x36xbf16>, vector<36x128xbf16>, vector<392x128xf32> -> vector<392x128xf32>
    %cst_3 = arith.constant dense<0.000000e+00> : vector<128xf32>
    %3 = vector.multi_reduction <add>, %2, %cst_3 [0] : vector<392x128xf32> to vector<128xf32>
    %4 = vector.shape_cast %3 : vector<128xf32> to vector<1x128xf32>
    %cst_4 = arith.constant 0.00255102036 : f32
    %5 = vector.broadcast %cst_4 : f32 to vector<1x128xf32>
    %6 = arith.mulf %4, %5 : vector<1x128xf32>
    %7 = vector.broadcast %6 : vector<1x128xf32> to vector<392x128xf32>
    %8 = arith.subf %2, %7 : vector<392x128xf32>
    %9 = arith.mulf %8, %8 : vector<392x128xf32>
    %cst_5 = arith.constant dense<0.000000e+00> : vector<128xf32>
    %10 = vector.multi_reduction <add>, %9, %cst_5 [0] : vector<392x128xf32> to vector<128xf32>
    %11 = vector.shape_cast %10 : vector<128xf32> to vector<1x128xf32>
    %cst_6 = arith.constant 0.00255102036 : f32
    %12 = vector.broadcast %cst_6 : f32 to vector<1x128xf32>
    %13 = arith.mulf %11, %12 : vector<1x128xf32>
    %c0_7 = arith.constant 0 : index
    %c0_8 = arith.constant 0 : index
    %14 = vector.load %arg3[%c0_7, %c0_8] : memref<1x128xf32, #tpu.memory_space<vmem>>, vector<1x128xf32>
    %cst_9 = arith.constant 9.99999974E-6 : f32
    %15 = vector.broadcast %cst_9 : f32 to vector<1x128xf32>
    %16 = arith.addf %13, %15 : vector<1x128xf32>
    %17 = math.rsqrt %16 : vector<1x128xf32>
    %18 = arith.mulf %14, %17 : vector<1x128xf32>
    %19 = vector.broadcast %18 : vector<1x128xf32> to vector<392x128xf32>
    %20 = arith.mulf %8, %19 : vector<392x128xf32>
    %c0_10 = arith.constant 0 : index
    %c0_11 = arith.constant 0 : index
    %21 = vector.load %arg4[%c0_10, %c0_11] : memref<1x128xf32, #tpu.memory_space<vmem>>, vector<1x128xf32>
    %22 = vector.broadcast %21 : vector<1x128xf32> to vector<392x128xf32>
    %23 = arith.addf %20, %22 : vector<392x128xf32>
    %cst_12 = arith.constant 0.000000e+00 : f32
    %24 = vector.broadcast %cst_12 : f32 to vector<392x128xf32>
    %25 = arith.maximumf %23, %24 : vector<392x128xf32>
    %c0_13 = arith.constant 0 : index
    %c0_14 = arith.constant 0 : index
    %26 = vector.load %arg5[%c0_13, %c0_14] : memref<392x128xf32, #tpu.memory_space<vmem>>, vector<392x128xf32>
    tpu.vector_store %arg5[%c0_13, %c0_14], %25 {strides = array<i32>} : memref<392x128xf32, #tpu.memory_space<vmem>>, vector<392x128xf32>,
    return
  }
  func.func @transform_0(%arg0: i32) -> (i32, i32) {
    %c0_i32 = arith.constant 0 : i32
    %c0_i32_0 = arith.constant 0 : i32
    %c0_i32_1 = arith.constant 0 : i32
    return %c0_i32, %c0_i32_0 : i32, i32
  }
  func.func @transform_1(%arg0: i32) -> (i32, i32) {
    %c0_i32 = arith.constant 0 : i32
    %c0_i32_0 = arith.constant 0 : i32
    %c0_i32_1 = arith.constant 0 : i32
    return %c0_i32, %c0_i32_0 : i32, i32
  }
  func.func @transform_2(%arg0: i32) -> (i32, i32) {
    %c0_i32 = arith.constant 0 : i32
    %c0_i32_0 = arith.constant 0 : i32
    %c0_i32_1 = arith.constant 0 : i32
    return %c0_i32, %c0_i32_0 : i32, i32
  }
  func.func @transform_3(%arg0: i32) -> (i32, i32) {
    %c0_i32 = arith.constant 0 : i32
    %c0_i32_0 = arith.constant 0 : i32
    %c0_i32_1 = arith.constant 0 : i32
    return %c0_i32, %c0_i32_0 : i32, i32
  }
  func.func @transform_4(%arg0: i32) -> (i32, i32) {
    %c0_i32 = arith.constant 0 : i32
    %c0_i32_0 = arith.constant 0 : i32
    %c0_i32_1 = arith.constant 0 : i32
    return %c0_i32, %c0_i32_0 : i32, i32
  }
}

</mosaic_0001>

<llo_original>
// kernel: block_forward.1
$region0: #{block_forward.1}
  #allocation0 [shape = 'u32[]', space=smem, size = 0x4, offset = 0x4, fixed_abs, tag = 'smem constant byte address 0x4 - core index']
  #allocation1 [shape = 'u32[72,128]{1,0:T(1,128)}', space=vmem, size = 0x9000, scoped, tag = 'internal scratch']
  %s0 = inlined_call_operand.vmem [shape: bf16[392,36], index: 0, kind: input, shape index: {}]
  %s1 = inlined_call_operand.vmem [shape: bf16[36,128], index: 1, kind: input, shape index: {}]
  %s2 = inlined_call_operand.vmem [shape: f32[1,128], index: 2, kind: input, shape index: {}]
  %s3 = inlined_call_operand.vmem [shape: f32[1,128], index: 3, kind: input, shape index: {}]
  %s4 = inlined_call_operand.vmem [shape: f32[392,128], index: 4, kind: output, shape index: {}]
  %s5 = sld [smem:[#allocation0]]
  $region26: #{block_forward.1} parent=0
    _
  %s7 = ssub.s32 1, %s5
  %s8 = scalar_select 0, %s7, %s5
  // Predicated region
  $region2: #{block_forward.1} parent=0 // pred_check
    _
  $region3: #{block_forward.1} parent=0 // pred_check_branch
    %10 = sbr.rel (0) target = $region5
  $region4: #{block_forward.1} parent=0 // pred_region
    _
  $region5: #{block_forward.1} parent=0 // pred_fallthru
    _
  // Predicated region
  $region6: #{block_forward.1} parent=0 // pred_check
    _
  $region7: #{block_forward.1} parent=0 // pred_check_branch
    %12 = sbr.rel (0) target = $region9
  $region8: #{block_forward.1} parent=0 // pred_region
    _
  $region9: #{block_forward.1} parent=0 // pred_fallthru
    _
  // Predicated region
  $region10: #{block_forward.1} parent=0 // pred_check
    _
  $region11: #{block_forward.1} parent=0 // pred_check_branch
    %14 = sbr.rel (0) target = $region13
  $region12: #{block_forward.1} parent=0 // pred_region
    _
  $region13: #{block_forward.1} parent=0 // pred_fallthru
    _
  // Predicated region
  $region14: #{block_forward.1} parent=0 // pred_check
    _
  $region15: #{block_forward.1} parent=0 // pred_check_branch
    %16 = sbr.rel (0) target = $region17
  $region16: #{block_forward.1} parent=0 // pred_region
    _
  $region17: #{block_forward.1} parent=0 // pred_fallthru
    _
  %v18 = vld [vmem:[%s0] sm:$0xf]
  %v19 = vld [vmem:[%s0 + $0x4] sm:$0xf]
  %v20 = vld [vmem:[%s0 + $0x8] sm:$0xf]
  %v21 = vld [vmem:[%s0 + $0xc] sm:$0xf]
  %v22 = vld [vmem:[%s0 + $0x10] sm:$0xf]
  %v23 = vld [vmem:[%s0 + $0x14] sm:$0xf]
  %v24 = vld [vmem:[%s0 + $0x18] sm:$0xf]
  %v25 = vld [vmem:[%s0 + $0x1c] sm:$0xf]
  %v26 = vld [vmem:[%s0 + $0x20] sm:$0xf]
  %v27 = vld [vmem:[%s0 + $0x24] sm:$0xf]
  %v28 = vld [vmem:[%s0 + $0x28] sm:$0xf]
  %v29 = vld [vmem:[%s0 + $0x2c] sm:$0xf]
  %v30 = vld [vmem:[%s0 + $0x30] sm:$0xf]
  %v31 = vld [vmem:[%s0 + $0x34] sm:$0xf]
  %v32 = vld [vmem:[%s0 + $0x38] sm:$0xf]
  %v33 = vld [vmem:[%s0 + $0x3c] sm:$0xf]
  %v34 = vld [vmem:[%s0 + $0x40] sm:$0xf]
  %v35 = vld [vmem:[%s0 + $0x44] sm:$0xf]
  %v36 = vld [vmem:[%s0 + $0x48] sm:$0xf]
  %v37 = vld [vmem:[%s0 + $0x4c] sm:$0xf]
  %v38 = vld [vmem:[%s0 + $0x50] sm:$0xf]
  %v39 = vld [vmem:[%s0 + $0x54] sm:$0xf]
  %v40 = vld [vmem:[%s0 + $0x58] sm:$0xf]
  %v41 = vld [vmem:[%s0 + $0x5c] sm:$0xf]
  %v42 = vld [vmem:[%s0 + $0x60] sm:$0xf]
  %v43 = vld [vmem:[%s0 + $0x64] sm:$0xf]
  %v44 = vld [vmem:[%s0 + $0x68] sm:$0xf]
  %v45 = vld [vmem:[%s0 + $0x6c] sm:$0xf]
  %v46 = vld [vmem:[%s0 + $0x70] sm:$0xf]
  %v47 = vld [vmem:[%s0 + $0x74] sm:$0xf]
  %v48 = vld [vmem:[%s0 + $0x78] sm:$0xf]
  %v49 = vld [vmem:[%s0 + $0x7c] sm:$0xf]
  %v50 = vld [vmem:[%s0 + $0x80] sm:$0xf]
  %v51 = vld [vmem:[%s0 + $0x84] sm:$0xf]
  %v52 = vld [vmem:[%s0 + $0x88] sm:$0xf]
  %v53 = vld [vmem:[%s0 + $0x8c] sm:$0xf]
  %v54 = vld [vmem:[%s0 + $0x90] sm:$0xf]
  %v55 = vld [vmem:[%s0 + $0x94] sm:$0xf]
  %v56 = vld [vmem:[%s0 + $0x98] sm:$0xf]
  %v57 = vld [vmem:[%s0 + $0x9c] sm:$0xf]
  %v58 = vld [vmem:[%s0 + $0xa0] sm:$0xf]
  %v59 = vld [vmem:[%s0 + $0xa4] sm:$0xf]
  %v60 = vld [vmem:[%s0 + $0xa8] sm:$0xf]
  %v61 = vld [vmem:[%s0 + $0xac] sm:$0xf]
  %v62 = vld [vmem:[%s0 + $0xb0] sm:$0xf]
  %v63 = vld [vmem:[%s0 + $0xb4] sm:$0xf]
  %v64 = vld [vmem:[%s0 + $0xb8] sm:$0xf]
  %v65 = vld [vmem:[%s0 + $0xbc] sm:$0xf]
  %v66 = vld [vmem:[%s0 + $0xc0] sm:$0xf]
  %v67 = vld [vmem:[%s1] sm:$0xf]
  %v68 = vld [vmem:[%s1 + $0x4] sm:$0xf]
  %v69 = vld [vmem:[%s1 + $0x8] sm:$0xf]
  %v70 = vld [vmem:[%s1 + $0xc] sm:$0xf]
  %v71 = vld [vmem:[%s1 + $0x10] sm:$0x3]
  %v121 = vunpack.c.l.b16 %v18
  %v122 = vunpack.c.l.b16 %v19
  %v123 = vunpack.c.l.b16 %v20
  %v124 = vunpack.c.l.b16 %v21
  %v125 = vunpack.c.l.b16 %v22
  %v126 = vunpack.c.l.b16 %v23
  %v127 = vunpack.c.l.b16 %v24
  %v128 = vunpack.c.l.b16 %v25
  %v129 = vunpack.c.l.b16 %v26
  %v130 = vunpack.c.l.b16 %v27
  %v131 = vunpack.c.l.b16 %v28
  %v132 = vunpack.c.l.b16 %v29
  %v133 = vunpack.c.l.b16 %v30
  %v134 = vunpack.c.l.b16 %v31
  %v135 = vunpack.c.l.b16 %v32
  %v136 = vunpack.c.l.b16 %v33
  %v137 = vunpack.c.l.b16 %v34
  %v138 = vunpack.c.l.b16 %v35
  %v139 = vunpack.c.l.b16 %v36
  %v140 = vunpack.c.l.b16 %v37
  %v141 = vunpack.c.l.b16 %v38
  %v142 = vunpack.c.l.b16 %v39
  %v143 = vunpack.c.l.b16 %v40
  %v144 = vunpack.c.l.b16 %v41
  %v145 = vunpack.c.l.b16 %v42
  %v146 = vunpack.c.l.b16 %v43
  %v147 = vunpack.c.l.b16 %v44
  %v148 = vunpack.c.l.b16 %v45
  %v149 = vunpack.c.l.b16 %v46
  %v150 = vunpack.c.l.b16 %v47
  %v151 = vunpack.c.l.b16 %v48
  %v152 = vunpack.c.l.b16 %v49
  %v153 = vunpack.c.l.b16 %v50
  %v154 = vunpack.c.l.b16 %v51
  %v155 = vunpack.c.l.b16 %v52
  %v156 = vunpack.c.l.b16 %v53
  %v157 = vunpack.c.l.b16 %v54
  %v158 = vunpack.c.l.b16 %v55
  %v159 = vunpack.c.l.b16 %v56
  %v160 = vunpack.c.l.b16 %v57
  %v161 = vunpack.c.l.b16 %v58
  %v162 = vunpack.c.l.b16 %v59
  %v163 = vunpack.c.l.b16 %v60
  %v164 = vunpack.c.l.b16 %v61
  %v165 = vunpack.c.l.b16 %v62
  %v166 = vunpack.c.l.b16 %v63
  %v167 = vunpack.c.l.b16 %v64
  %v168 = vunpack.c.l.b16 %v65
  %v169 = vunpack.c.l.b16 %v66
  %v170 = vpack.c.b16 %v122, %v121
  %v171 = vpack.c.b16 %v124, %v123
  %v172 = vpack.c.b16 %v126, %v125
  %v173 = vpack.c.b16 %v128, %v127
  %v174 = vpack.c.b16 %v130, %v129
  %v175 = vpack.c.b16 %v132, %v131
  %v176 = vpack.c.b16 %v134, %v133
  %v177 = vpack.c.b16 %v136, %v135
  %v178 = vpack.c.b16 %v138, %v137
  %v179 = vpack.c.b16 %v140, %v139
  %v180 = vpack.c.b16 %v142, %v141
  %v181 = vpack.c.b16 %v144, %v143
  %v182 = vpack.c.b16 %v146, %v145
  %v183 = vpack.c.b16 %v148, %v147
  %v184 = vpack.c.b16 %v150, %v149
  %v185 = vpack.c.b16 %v152, %v151
  %v186 = vpack.c.b16 %v154, %v153
  %v187 = vpack.c.b16 %v156, %v155
  %v188 = vpack.c.b16 %v158, %v157
  %v189 = vpack.c.b16 %v160, %v159
  %v190 = vpack.c.b16 %v162, %v161
  %v191 = vpack.c.b16 %v164, %v163
  %v192 = vpack.c.b16 %v166, %v165
  %v193 = vpack.c.b16 %v168, %v167
  %v194 = vpack.c.b16 %v169, %v169
  %v200 = vunpack.c.l.b16 %v67
  %v201 = vunpack.c.l.b16 %v68
  %v202 = vunpack.c.l.b16 %v69
  %v203 = vunpack.c.l.b16 %v70
  %v204 = vunpack.c.l.b16 %v71
  %v205 = vpack.c.b16 %v201, %v200
  %v206 = vpack.c.b16 %v203, %v202
  %v207 = vpack.c.b16 %v204, %v204
  %vm210 = vcmask 293888
  %v212 = vsel %vm210, %v170, 0
  %v215 = vsel %vm210, %v171, 0
  %v218 = vsel %vm210, %v172, 0
  %v221 = vsel %vm210, %v173, 0
  %v224 = vsel %vm210, %v174, 0
  %v227 = vsel %vm210, %v175, 0
  %v230 = vsel %vm210, %v176, 0
  %v233 = vsel %vm210, %v177, 0
  %v236 = vsel %vm210, %v178, 0
  %v239 = vsel %vm210, %v179, 0
  %v242 = vsel %vm210, %v180, 0
  %v245 = vsel %vm210, %v181, 0
  %v248 = vsel %vm210, %v182, 0
  %v251 = vsel %vm210, %v183, 0
  %v254 = vsel %vm210, %v184, 0
  %v257 = vsel %vm210, %v185, 0
  %v260 = vsel %vm210, %v186, 0
  %v263 = vsel %vm210, %v187, 0
  %v266 = vsel %vm210, %v188, 0
  %v269 = vsel %vm210, %v189, 0
  %v272 = vsel %vm210, %v190, 0
  %v275 = vsel %vm210, %v191, 0
  %v278 = vsel %vm210, %v192, 0
  %v281 = vsel %vm210, %v193, 0
  %v284 = vsel %vm210, %v194, 0
  %vm286 = vcmask 1041408
  %v288 = vsel %vm286, %v207, 0
  %290 = vmatpush.bf16.msra.mxu0 0
  %291 = vmatpush.bf16.msra.mxu0 0
  %292 = vmatpush.bf16.msra.mxu0 0
  %293 = vmatpush.bf16.msra.mxu0 0
  %294 = vmatpush.bf16.msra.mxu0 0
  %295 = vmatpush.bf16.msra.mxu0 %v288
  %296 = vmatpush.bf16.msra.mxu0 %v206
  %297 = vmatpush.bf16.msra.mxu0 %v205
  %298 = vmatmul.bf16.gmra.mxu0 %v212
  %v299 = vpop.f32.mrf.mxu0
  %v300 = vadd.f32 0.0, %v299
  %v301 = vpop.f32.mrf.mxu0
  %v302 = vadd.f32 0.0, %v301
  %303 = vmatmul.bf16.gmra.mxu0 %v215
  %v304 = vpop.f32.mrf.mxu0
  %v305 = vadd.f32 0.0, %v304
  %v306 = vpop.f32.mrf.mxu0
  %v307 = vadd.f32 0.0, %v306
  %308 = vmatmul.bf16.gmra.mxu0 %v218
  %v309 = vpop.f32.mrf.mxu0
  %v310 = vadd.f32 0.0, %v309
  %v311 = vpop.f32.mrf.mxu0
  %v312 = vadd.f32 0.0, %v311
  %313 = vmatmul.bf16.gmra.mxu0 %v221
  %v314 = vpop.f32.mrf.mxu0
  %v315 = vadd.f32 0.0, %v314
  %v316 = vpop.f32.mrf.mxu0
  %v317 = vadd.f32 0.0, %v316
  %318 = vmatmul.bf16.gmra.mxu0 %v224
  %v319 = vpop.f32.mrf.mxu0
  %v320 = vadd.f32 0.0, %v319
  %v321 = vpop.f32.mrf.mxu0
  %v322 = vadd.f32 0.0, %v321
  %323 = vmatmul.bf16.gmra.mxu0 %v227
  %v324 = vpop.f32.mrf.mxu0
  %v325 = vadd.f32 0.0, %v324
  %v326 = vpop.f32.mrf.mxu0
  %v327 = vadd.f32 0.0, %v326
  %328 = vmatmul.bf16.gmra.mxu0 %v230
  %v329 = vpop.f32.mrf.mxu0
  %v330 = vadd.f32 0.0, %v329
  %v331 = vpop.f32.mrf.mxu0
  %v332 = vadd.f32 0.0, %v331
  %333 = vmatmul.bf16.gmra.mxu0 %v233
  %v334 = vpop.f32.mrf.mxu0
  %v335 = vadd.f32 0.0, %v334
  %v336 = vpop.f32.mrf.mxu0
  %v337 = vadd.f32 0.0, %v336
  %338 = vmatmul.bf16.gmra.mxu0 %v236
  %v339 = vpop.f32.mrf.mxu0
  %v340 = vadd.f32 0.0, %v339
  %v341 = vpop.f32.mrf.mxu0
  %v342 = vadd.f32 0.0, %v341
  %343 = vmatmul.bf16.gmra.mxu0 %v239
  %v344 = vpop.f32.mrf.mxu0
  %v345 = vadd.f32 0.0, %v344
  %v346 = vpop.f32.mrf.mxu0
  %v347 = vadd.f32 0.0, %v346
  %348 = vmatmul.bf16.gmra.mxu0 %v242
  %v349 = vpop.f32.mrf.mxu0
  %v350 = vadd.f32 0.0, %v349
  %v351 = vpop.f32.mrf.mxu0
  %v352 = vadd.f32 0.0, %v351
  %353 = vmatmul.bf16.gmra.mxu0 %v245
  %v354 = vpop.f32.mrf.mxu0
  %v355 = vadd.f32 0.0, %v354
  %v356 = vpop.f32.mrf.mxu0
  %v357 = vadd.f32 0.0, %v356
  %358 = vmatmul.bf16.gmra.mxu0 %v248
  %v359 = vpop.f32.mrf.mxu0
  %v360 = vadd.f32 0.0, %v359
  %v361 = vpop.f32.mrf.mxu0
  %v362 = vadd.f32 0.0, %v361
  %363 = vmatmul.bf16.gmra.mxu0 %v251
  %v364 = vpop.f32.mrf.mxu0
  %v365 = vadd.f32 0.0, %v364
  %v366 = vpop.f32.mrf.mxu0
  %v367 = vadd.f32 0.0, %v366
  %368 = vmatmul.bf16.gmra.mxu0 %v254
  %v369 = vpop.f32.mrf.mxu0
  %v370 = vadd.f32 0.0, %v369
  %v371 = vpop.f32.mrf.mxu0
  %v372 = vadd.f32 0.0, %v371
  %373 = vmatmul.bf16.gmra.mxu0 %v257
  %v374 = vpop.f32.mrf.mxu0
  %v375 = vadd.f32 0.0, %v374
  %v376 = vpop.f32.mrf.mxu0
  %v377 = vadd.f32 0.0, %v376
  %378 = vmatmul.bf16.gmra.mxu0 %v260
  %v379 = vpop.f32.mrf.mxu0
  %v380 = vadd.f32 0.0, %v379
  %v381 = vpop.f32.mrf.mxu0
  %v382 = vadd.f32 0.0, %v381
  %383 = vmatmul.bf16.gmra.mxu0 %v263
  %v384 = vpop.f32.mrf.mxu0
  %v385 = vadd.f32 0.0, %v384
  %v386 = vpop.f32.mrf.mxu0
  %v387 = vadd.f32 0.0, %v386
  %388 = vmatmul.bf16.gmra.mxu0 %v266
  %v389 = vpop.f32.mrf.mxu0
  %v390 = vadd.f32 0.0, %v389
  %v391 = vpop.f32.mrf.mxu0
  %v392 = vadd.f32 0.0, %v391
  %393 = vmatmul.bf16.gmra.mxu0 %v269
  %v394 = vpop.f32.mrf.mxu0
  %v395 = vadd.f32 0.0, %v394
  %v396 = vpop.f32.mrf.mxu0
  %v397 = vadd.f32 0.0, %v396
  %398 = vmatmul.bf16.gmra.mxu0 %v272
  %v399 = vpop.f32.mrf.mxu0
  %v400 = vadd.f32 0.0, %v399
  %v401 = vpop.f32.mrf.mxu0
  %v402 = vadd.f32 0.0, %v401
  %403 = vmatmul.bf16.gmra.mxu0 %v275
  %v404 = vpop.f32.mrf.mxu0
  %v405 = vadd.f32 0.0, %v404
  %v406 = vpop.f32.mrf.mxu0
  %v407 = vadd.f32 0.0, %v406
  %408 = vmatmul.bf16.gmra.mxu0 %v278
  %v409 = vpop.f32.mrf.mxu0
  %v410 = vadd.f32 0.0, %v409
  %v411 = vpop.f32.mrf.mxu0
  %v412 = vadd.f32 0.0, %v411
  %413 = vmatmul.bf16.gmra.mxu0 %v281
  %v414 = vpop.f32.mrf.mxu0
  %v415 = vadd.f32 0.0, %v414
  %v416 = vpop.f32.mrf.mxu0
  %v417 = vadd.f32 0.0, %v416
  %418 = vmatmul.bf16.gmra.mxu0 %v284
  %v419 = vpop.f32.mrf.mxu0
  %v420 = vadd.f32 0.0, %v419
  %v421 = vpop.f32.mrf.mxu0
  %422 = vdwg.mxu0
  %v423 = vadd.f32 %v300, %v302
  %v424 = vadd.f32 %v423, %v305
  %v425 = vadd.f32 %v424, %v307
  %v426 = vadd.f32 %v425, %v310
  %v427 = vadd.f32 %v426, %v312
  %v428 = vadd.f32 %v427, %v315
  %v429 = vadd.f32 %v428, %v317
  %v430 = vadd.f32 %v429, %v320
  %v431 = vadd.f32 %v430, %v322
  %v432 = vadd.f32 %v431, %v325
  %v433 = vadd.f32 %v432, %v327
  %v434 = vadd.f32 %v433, %v330
  %v435 = vadd.f32 %v434, %v332
  %v436 = vadd.f32 %v435, %v335
  %v437 = vadd.f32 %v436, %v337
  %v438 = vadd.f32 %v437, %v340
  %v439 = vadd.f32 %v438, %v342
  %v440 = vadd.f32 %v439, %v345
  %v441 = vadd.f32 %v440, %v347
  %v442 = vadd.f32 %v441, %v350
  %v443 = vadd.f32 %v442, %v352
  %v444 = vadd.f32 %v443, %v355
  %v445 = vadd.f32 %v444, %v357
  %v446 = vadd.f32 %v445, %v360
  %v447 = vadd.f32 %v446, %v362
  %v448 = vadd.f32 %v447, %v365
  %v449 = vadd.f32 %v448, %v367
  %v450 = vadd.f32 %v449, %v370
  %v451 = vadd.f32 %v450, %v372
  %v452 = vadd.f32 %v451, %v375
  %v453 = vadd.f32 %v452, %v377
  %v454 = vadd.f32 %v453, %v380
  %v455 = vadd.f32 %v454, %v382
  %v456 = vadd.f32 %v455, %v385
  %v457 = vadd.f32 %v456, %v387
  %v458 = vadd.f32 %v457, %v390
  %v459 = vadd.f32 %v458, %v392
  %v460 = vadd.f32 %v459, %v395
  %v461 = vadd.f32 %v460, %v397
  %v462 = vadd.f32 %v461, %v400
  %v463 = vadd.f32 %v462, %v402
  %v464 = vadd.f32 %v463, %v405
  %v465 = vadd.f32 %v464, %v407
  %v466 = vadd.f32 %v465, %v410
  %v467 = vadd.f32 %v466, %v412
  %v468 = vadd.f32 %v467, %v415
  %v469 = vadd.f32 %v468, %v417
  %v470 = vadd.f32 %v469, %v420
  %v471 = vrot.slane %v470, 4
  %v472 = vadd.f32 %v470, %v471
  %v473 = vrot.slane %v472, 2
  %v474 = vadd.f32 %v472, %v473
  %v475 = vrot.slane %v474, 1
  %v476 = vadd.f32 %v474, %v475
  %v477 = vmul.f32 %v476, 0.0025510204
  %v478 = vsub.f32 %v300, %v477
  %v479 = vsub.f32 %v302, %v477
  %v480 = vsub.f32 %v305, %v477
  %v481 = vsub.f32 %v307, %v477
  %v482 = vsub.f32 %v310, %v477
  %v483 = vsub.f32 %v312, %v477
  %v484 = vsub.f32 %v315, %v477
  %v485 = vsub.f32 %v317, %v477
  %v486 = vsub.f32 %v320, %v477
  %v487 = vsub.f32 %v322, %v477
  %v488 = vsub.f32 %v325, %v477
  %v489 = vsub.f32 %v327, %v477
  %v490 = vsub.f32 %v330, %v477
  %v491 = vsub.f32 %v332, %v477
  %v492 = vsub.f32 %v335, %v477
  %v493 = vsub.f32 %v337, %v477
  %v494 = vsub.f32 %v340, %v477
  %v495 = vsub.f32 %v342, %v477
  %v496 = vsub.f32 %v345, %v477
  %v497 = vsub.f32 %v347, %v477
  %v498 = vsub.f32 %v350, %v477
  %v499 = vsub.f32 %v352, %v477
  %v500 = vsub.f32 %v355, %v477
  %v501 = vsub.f32 %v357, %v477
  %v502 = vsub.f32 %v360, %v477
  %v503 = vsub.f32 %v362, %v477
  %v504 = vsub.f32 %v365, %v477
  %v505 = vsub.f32 %v367, %v477
  %v506 = vsub.f32 %v370, %v477
  %v507 = vsub.f32 %v372, %v477
  %v508 = vsub.f32 %v375, %v477
  %v509 = vsub.f32 %v377, %v477
  %v510 = vsub.f32 %v380, %v477
  %v511 = vsub.f32 %v382, %v477
  %v512 = vsub.f32 %v385, %v477
  %v513 = vsub.f32 %v387, %v477
  %v514 = vsub.f32 %v390, %v477
  %v515 = vsub.f32 %v392, %v477
  %v516 = vsub.f32 %v395, %v477
  %v517 = vsub.f32 %v397, %v477
  %v518 = vsub.f32 %v400, %v477
  %v519 = vsub.f32 %v402, %v477
  %v520 = vsub.f32 %v405, %v477
  %v521 = vsub.f32 %v407, %v477
  %v522 = vsub.f32 %v410, %v477
  %v523 = vsub.f32 %v412, %v477
  %v524 = vsub.f32 %v415, %v477
  %v525 = vsub.f32 %v417, %v477
  %v526 = vsub.f32 %v420, %v477
  %v527 = vmul.f32 %v478, %v478
  %v528 = vmul.f32 %v479, %v479
  %v529 = vmul.f32 %v480, %v480
  %v530 = vmul.f32 %v481, %v481
  %v531 = vmul.f32 %v482, %v482
  %v532 = vmul.f32 %v483, %v483
  %v533 = vmul.f32 %v484, %v484
  %v534 = vmul.f32 %v485, %v485
  %v535 = vmul.f32 %v486, %v486
  %v536 = vmul.f32 %v487, %v487
  %v537 = vmul.f32 %v488, %v488
  %v538 = vmul.f32 %v489, %v489
  %v539 = vmul.f32 %v490, %v490
  %v540 = vmul.f32 %v491, %v491
  %v541 = vmul.f32 %v492, %v492
  %v542 = vmul.f32 %v493, %v493
  %v543 = vmul.f32 %v494, %v494
  %v544 = vmul.f32 %v495, %v495
  %v545 = vmul.f32 %v496, %v496
  %v546 = vmul.f32 %v497, %v497
  %v547 = vmul.f32 %v498, %v498
  %v548 = vmul.f32 %v499, %v499
  %v549 = vmul.f32 %v500, %v500
  %v550 = vmul.f32 %v501, %v501
  %v551 = vmul.f32 %v502, %v502
  %v552 = vmul.f32 %v503, %v503
  %v553 = vmul.f32 %v504, %v504
  %v554 = vmul.f32 %v505, %v505
  %v555 = vmul.f32 %v506, %v506
  %v556 = vmul.f32 %v507, %v507
  %v557 = vmul.f32 %v508, %v508
  %v558 = vmul.f32 %v509, %v509
  %v559 = vmul.f32 %v510, %v510
  %v560 = vmul.f32 %v511, %v511
  %v561 = vmul.f32 %v512, %v512
  %v562 = vmul.f32 %v513, %v513
  %v563 = vmul.f32 %v514, %v514
  %v564 = vmul.f32 %v515, %v515
  %v565 = vmul.f32 %v516, %v516
  %v566 = vmul.f32 %v517, %v517
  %v567 = vmul.f32 %v518, %v518
  %v568 = vmul.f32 %v519, %v519
  %v569 = vmul.f32 %v520, %v520
  %v570 = vmul.f32 %v521, %v521
  %v571 = vmul.f32 %v522, %v522
  %v572 = vmul.f32 %v523, %v523
  %v573 = vmul.f32 %v524, %v524
  %v574 = vmul.f32 %v525, %v525
  %v575 = vmul.f32 %v526, %v526
  %v576 = vadd.f32 %v527, %v528
  %v577 = vadd.f32 %v576, %v529
  %v578 = vadd.f32 %v577, %v530
  %v579 = vadd.f32 %v578, %v531
  %v580 = vadd.f32 %v579, %v532
  %v581 = vadd.f32 %v580, %v533
  %v582 = vadd.f32 %v581, %v534
  %v583 = vadd.f32 %v582, %v535
  %v584 = vadd.f32 %v583, %v536
  %v585 = vadd.f32 %v584, %v537
  %v586 = vadd.f32 %v585, %v538
  %v587 = vadd.f32 %v586, %v539
  %v588 = vadd.f32 %v587, %v540
  %v589 = vadd.f32 %v588, %v541
  %v590 = vadd.f32 %v589, %v542
  %v591 = vadd.f32 %v590, %v543
  %v592 = vadd.f32 %v591, %v544
  %v593 = vadd.f32 %v592, %v545
  %v594 = vadd.f32 %v593, %v546
  %v595 = vadd.f32 %v594, %v547
  %v596 = vadd.f32 %v595, %v548
  %v597 = vadd.f32 %v596, %v549
  %v598 = vadd.f32 %v597, %v550
  %v599 = vadd.f32 %v598, %v551
  %v600 = vadd.f32 %v599, %v552
  %v601 = vadd.f32 %v600, %v553
  %v602 = vadd.f32 %v601, %v554
  %v603 = vadd.f32 %v602, %v555
  %v604 = vadd.f32 %v603, %v556
  %v605 = vadd.f32 %v604, %v557
  %v606 = vadd.f32 %v605, %v558
  %v607 = vadd.f32 %v606, %v559
  %v608 = vadd.f32 %v607, %v560
  %v609 = vadd.f32 %v608, %v561
  %v610 = vadd.f32 %v609, %v562
  %v611 = vadd.f32 %v610, %v563
  %v612 = vadd.f32 %v611, %v564
  %v613 = vadd.f32 %v612, %v565
  %v614 = vadd.f32 %v613, %v566
  %v615 = vadd.f32 %v614, %v567
  %v616 = vadd.f32 %v615, %v568
  %v617 = vadd.f32 %v616, %v569
  %v618 = vadd.f32 %v617, %v570
  %v619 = vadd.f32 %v618, %v571
  %v620 = vadd.f32 %v619, %v572
  %v621 = vadd.f32 %v620, %v573
  %v622 = vadd.f32 %v621, %v574
  %v623 = vadd.f32 %v622, %v575
  %v624 = vrot.slane %v623, 4
  %v625 = vadd.f32 %v623, %v624
  %v626 = vrot.slane %v625, 2
  %v627 = vadd.f32 %v625, %v626
  %v628 = vrot.slane %v627, 1
  %v629 = vadd.f32 %v627, %v628
  %v630 = vmul.f32 %v629, 0.0025510204
  %v631 = vld [vmem:[%s2] sm:$0x1]
  %v632 = vadd.f32 %v630, 1e-05
  %v633 = vrsqrt.pop %v632
  %v634 = vmul.f32 %v633, %v632
  %v635 = vmul.f32 %v634, %v633
  %v636 = vmul.f32 0.5, %v635
  %v637 = vsub.f32 1.5, %v636
  %v638 = vmul.f32 %v633, %v637
  %vm639 = vweird.f32 %v632
  %vm640 = vweird.f32 %v633
  %vm641 = vmor %vm639, %vm640
  %v642 = vsel %vm641, %v633, %v638
  %v643 = vmul.f32 %v631, %v642
  %v645 = vperm.slane %v643, 0
  %v647 = vmul.f32 %v478, %v645
  %v648 = vmul.f32 %v479, %v645
  %v649 = vmul.f32 %v480, %v645
  %v650 = vmul.f32 %v481, %v645
  %v651 = vmul.f32 %v482, %v645
  %v652 = vmul.f32 %v483, %v645
  %v653 = vmul.f32 %v484, %v645
  %v654 = vmul.f32 %v485, %v645
  %v655 = vmul.f32 %v486, %v645
  %v656 = vmul.f32 %v487, %v645
  %v657 = vmul.f32 %v488, %v645
  %v658 = vmul.f32 %v489, %v645
  %v659 = vmul.f32 %v490, %v645
  %v660 = vmul.f32 %v491, %v645
  %v661 = vmul.f32 %v492, %v645
  %v662 = vmul.f32 %v493, %v645
  %v663 = vmul.f32 %v494, %v645
  %v664 = vmul.f32 %v495, %v645
  %v665 = vmul.f32 %v496, %v645
  %v666 = vmul.f32 %v497, %v645
  %v667 = vmul.f32 %v498, %v645
  %v668 = vmul.f32 %v499, %v645
  %v669 = vmul.f32 %v500, %v645
  %v670 = vmul.f32 %v501, %v645
  %v671 = vmul.f32 %v502, %v645
  %v672 = vmul.f32 %v503, %v645
  %v673 = vmul.f32 %v504, %v645
  %v674 = vmul.f32 %v505, %v645
  %v675 = vmul.f32 %v506, %v645
  %v676 = vmul.f32 %v507, %v645
  %v677 = vmul.f32 %v508, %v645
  %v678 = vmul.f32 %v509, %v645
  %v679 = vmul.f32 %v510, %v645
  %v680 = vmul.f32 %v511, %v645
  %v681 = vmul.f32 %v512, %v645
  %v682 = vmul.f32 %v513, %v645
  %v683 = vmul.f32 %v514, %v645
  %v684 = vmul.f32 %v515, %v645
  %v685 = vmul.f32 %v516, %v645
  %v686 = vmul.f32 %v517, %v645
  %v687 = vmul.f32 %v518, %v645
  %v688 = vmul.f32 %v519, %v645
  %v689 = vmul.f32 %v520, %v645
  %v690 = vmul.f32 %v521, %v645
  %v691 = vmul.f32 %v522, %v645
  %v692 = vmul.f32 %v523, %v645
  %v693 = vmul.f32 %v524, %v645
  %v694 = vmul.f32 %v525, %v645
  %v695 = vmul.f32 %v526, %v645
  %v696 = vld [vmem:[%s3] sm:$0x1]
  %v698 = vperm.slane %v696, 0
  %v700 = vadd.f32 %v647, %v698
  %v701 = vadd.f32 %v648, %v698
  %v702 = vadd.f32 %v649, %v698
  %v703 = vadd.f32 %v650, %v698
  %v704 = vadd.f32 %v651, %v698
  %v705 = vadd.f32 %v652, %v698
  %v706 = vadd.f32 %v653, %v698
  %v707 = vadd.f32 %v654, %v698
  %v708 = vadd.f32 %v655, %v698
  %v709 = vadd.f32 %v656, %v698
  %v710 = vadd.f32 %v657, %v698
  %v711 = vadd.f32 %v658, %v698
  %v712 = vadd.f32 %v659, %v698
  %v713 = vadd.f32 %v660, %v698
  %v714 = vadd.f32 %v661, %v698
  %v715 = vadd.f32 %v662, %v698
  %v716 = vadd.f32 %v663, %v698
  %v717 = vadd.f32 %v664, %v698
  %v718 = vadd.f32 %v665, %v698
  %v719 = vadd.f32 %v666, %v698
  %v720 = vadd.f32 %v667, %v698
  %v721 = vadd.f32 %v668, %v698
  %v722 = vadd.f32 %v669, %v698
  %v723 = vadd.f32 %v670, %v698
  %v724 = vadd.f32 %v671, %v698
  %v725 = vadd.f32 %v672, %v698
  %v726 = vadd.f32 %v673, %v698
  %v727 = vadd.f32 %v674, %v698
  %v728 = vadd.f32 %v675, %v698
  %v729 = vadd.f32 %v676, %v698
  %v730 = vadd.f32 %v677, %v698
  %v731 = vadd.f32 %v678, %v698
  %v732 = vadd.f32 %v679, %v698
  %v733 = vadd.f32 %v680, %v698
  %v734 = vadd.f32 %v681, %v698
  %v735 = vadd.f32 %v682, %v698
  %v736 = vadd.f32 %v683, %v698
  %v737 = vadd.f32 %v684, %v698
  %v738 = vadd.f32 %v685, %v698
  %v739 = vadd.f32 %v686, %v698
  %v740 = vadd.f32 %v687, %v698
  %v741 = vadd.f32 %v688, %v698
  %v742 = vadd.f32 %v689, %v698
  %v743 = vadd.f32 %v690, %v698
  %v744 = vadd.f32 %v691, %v698
  %v745 = vadd.f32 %v692, %v698
  %v746 = vadd.f32 %v693, %v698
  %v747 = vadd.f32 %v694, %v698
  %v748 = vadd.f32 %v695, %v698
  %v749 = vmax.f32 %v700, 0.0
  %v750 = vmax.f32 %v701, 0.0
  %v751 = vmax.f32 %v702, 0.0
  %v752 = vmax.f32 %v703, 0.0
  %v753 = vmax.f32 %v704, 0.0
  %v754 = vmax.f32 %v705, 0.0
  %v755 = vmax.f32 %v706, 0.0
  %v756 = vmax.f32 %v707, 0.0
  %v757 = vmax.f32 %v708, 0.0
  %v758 = vmax.f32 %v709, 0.0
  %v759 = vmax.f32 %v710, 0.0
  %v760 = vmax.f32 %v711, 0.0
  %v761 = vmax.f32 %v712, 0.0
  %v762 = vmax.f32 %v713, 0.0
  %v763 = vmax.f32 %v714, 0.0
  %v764 = vmax.f32 %v715, 0.0
  %v765 = vmax.f32 %v716, 0.0
  %v766 = vmax.f32 %v717, 0.0
  %v767 = vmax.f32 %v718, 0.0
  %v768 = vmax.f32 %v719, 0.0
  %v769 = vmax.f32 %v720, 0.0
  %v770 = vmax.f32 %v721, 0.0
  %v771 = vmax.f32 %v722, 0.0
  %v772 = vmax.f32 %v723, 0.0
  %v773 = vmax.f32 %v724, 0.0
  %v774 = vmax.f32 %v725, 0.0
  %v775 = vmax.f32 %v726, 0.0
  %v776 = vmax.f32 %v727, 0.0
  %v777 = vmax.f32 %v728, 0.0
  %v778 = vmax.f32 %v729, 0.0
  %v779 = vmax.f32 %v730, 0.0
  %v780 = vmax.f32 %v731, 0.0
  %v781 = vmax.f32 %v732, 0.0
  %v782 = vmax.f32 %v733, 0.0
  %v783 = vmax.f32 %v734, 0.0
  %v784 = vmax.f32 %v735, 0.0
  %v785 = vmax.f32 %v736, 0.0
  %v786 = vmax.f32 %v737, 0.0
  %v787 = vmax.f32 %v738, 0.0
  %v788 = vmax.f32 %v739, 0.0
  %v789 = vmax.f32 %v740, 0.0
  %v790 = vmax.f32 %v741, 0.0
  %v791 = vmax.f32 %v742, 0.0
  %v792 = vmax.f32 %v743, 0.0
  %v793 = vmax.f32 %v744, 0.0
  %v794 = vmax.f32 %v745, 0.0
  %v795 = vmax.f32 %v746, 0.0
  %v796 = vmax.f32 %v747, 0.0
  %v797 = vmax.f32 %v748, 0.0
  %798 = vst [vmem:[%s4] sm:$0xff] %v749
  %799 = vst [vmem:[%s4 + $0x8] sm:$0xff] %v750
  %800 = vst [vmem:[%s4 + $0x10] sm:$0xff] %v751
  %801 = vst [vmem:[%s4 + $0x18] sm:$0xff] %v752
  %802 = vst [vmem:[%s4 + $0x20] sm:$0xff] %v753
  %803 = vst [vmem:[%s4 + $0x28] sm:$0xff] %v754
  %804 = vst [vmem:[%s4 + $0x30] sm:$0xff] %v755
  %805 = vst [vmem:[%s4 + $0x38] sm:$0xff] %v756
  %806 = vst [vmem:[%s4 + $0x40] sm:$0xff] %v757
  %807 = vst [vmem:[%s4 + $0x48] sm:$0xff] %v758
  %808 = vst [vmem:[%s4 + $0x50] sm:$0xff] %v759
  %809 = vst [vmem:[%s4 + $0x58] sm:$0xff] %v760
  %810 = vst [vmem:[%s4 + $0x60] sm:$0xff] %v761
  %811 = vst [vmem:[%s4 + $0x68] sm:$0xff] %v762
  %812 = vst [vmem:[%s4 + $0x70] sm:$0xff] %v763
  %813 = vst [vmem:[%s4 + $0x78] sm:$0xff] %v764
  %814 = vst [vmem:[%s4 + $0x80] sm:$0xff] %v765
  %815 = vst [vmem:[%s4 + $0x88] sm:$0xff] %v766
  %816 = vst [vmem:[%s4 + $0x90] sm:$0xff] %v767
  %817 = vst [vmem:[%s4 + $0x98] sm:$0xff] %v768
  %818 = vst [vmem:[%s4 + $0xa0] sm:$0xff] %v769
  %819 = vst [vmem:[%s4 + $0xa8] sm:$0xff] %v770
  %820 = vst [vmem:[%s4 + $0xb0] sm:$0xff] %v771
  %821 = vst [vmem:[%s4 + $0xb8] sm:$0xff] %v772
  %822 = vst [vmem:[%s4 + $0xc0] sm:$0xff] %v773
  %823 = vst [vmem:[%s4 + $0xc8] sm:$0xff] %v774
  %824 = vst [vmem:[%s4 + $0xd0] sm:$0xff] %v775
  %825 = vst [vmem:[%s4 + $0xd8] sm:$0xff] %v776
  %826 = vst [vmem:[%s4 + $0xe0] sm:$0xff] %v777
  %827 = vst [vmem:[%s4 + $0xe8] sm:$0xff] %v778
  %828 = vst [vmem:[%s4 + $0xf0] sm:$0xff] %v779
  %829 = vst [vmem:[%s4 + $0xf8] sm:$0xff] %v780
  %830 = vst [vmem:[%s4 + $0x100] sm:$0xff] %v781
  %831 = vst [vmem:[%s4 + $0x108] sm:$0xff] %v782
  %832 = vst [vmem:[%s4 + $0x110] sm:$0xff] %v783
  %833 = vst [vmem:[%s4 + $0x118] sm:$0xff] %v784
  %834 = vst [vmem:[%s4 + $0x120] sm:$0xff] %v785
  %835 = vst [vmem:[%s4 + $0x128] sm:$0xff] %v786
  %836 = vst [vmem:[%s4 + $0x130] sm:$0xff] %v787
  %837 = vst [vmem:[%s4 + $0x138] sm:$0xff] %v788
  %838 = vst [vmem:[%s4 + $0x140] sm:$0xff] %v789
  %839 = vst [vmem:[%s4 + $0x148] sm:$0xff] %v790
  %840 = vst [vmem:[%s4 + $0x150] sm:$0xff] %v791
  %841 = vst [vmem:[%s4 + $0x158] sm:$0xff] %v792
  %842 = vst [vmem:[%s4 + $0x160] sm:$0xff] %v793
  %843 = vst [vmem:[%s4 + $0x168] sm:$0xff] %v794
  %844 = vst [vmem:[%s4 + $0x170] sm:$0xff] %v795
  %845 = vst [vmem:[%s4 + $0x178] sm:$0xff] %v796
  %846 = vst [vmem:[%s4 + $0x180] sm:$0xff] %v797
  // Predicated region
  $region18: #{block_forward.1} parent=0 // pred_check
    _
  $region19: #{block_forward.1} parent=0 // pred_check_branch
    %848 = sbr.rel (0) target = $region21
  $region20: #{block_forward.1} parent=0 // pred_region
    _
  $region21: #{block_forward.1} parent=0 // pred_fallthru
    _
  // Predicated region
  $region22: #{block_forward.1} parent=0 // pred_check
    _
  $region23: #{block_forward.1} parent=0 // pred_check_branch
    %850 = sbr.rel (0) target = $region25
  $region24: #{block_forward.1} parent=0 // pred_region
    _
  $region25: #{block_forward.1} parent=0 // pred_fallthru
    _

</llo_original>
